<compile_context>
chip_gen: v7x
topology: tpu7x:2x2x1
jax: 0.10.0
libtpu: 0.0.40
codegen_flags: <defaults>
</compile_context>

<pallas_src>
from functools import lru_cache, partial

import jax
import jax.numpy as jnp
import numpy as np
from jax.experimental import pallas as pl
from jax.experimental.pallas import tpu as pltpu


# ---------------------------------------------------------------------------
# Shape-only constant tables (numpy, built once in the wrapper).
# ---------------------------------------------------------------------------
def _interp_matrix_1d(out_size, in_size):
    """1-D bilinear interpolation matrix, align_corners=True: (out_size, in_size)."""
    if out_size == 1:
        src = np.zeros((1,), np.float64)
    else:
        src = np.arange(out_size, dtype=np.float64) * (in_size - 1) / (out_size - 1)
    i0 = np.clip(np.floor(src).astype(np.int64), 0, in_size - 1)
    i1 = np.minimum(i0 + 1, in_size - 1)
    frac = src - i0
    mat = np.zeros((out_size, in_size), np.float64)
    mat[np.arange(out_size), i0] += 1.0 - frac
    mat[np.arange(out_size), i1] += frac
    return mat


def _tap_masks(H, W):
    """(9, 1, H*W) 0/1 masks: tap (kh, kw) valid where (h+kh-1, w+kw-1) is in range."""
    hh = np.arange(H)[:, None]
    ww = np.arange(W)[None, :]
    masks = np.zeros((9, 1, H * W), np.float32)
    for kh in range(3):
        for kw in range(3):
            dh, dw = kh - 1, kw - 1
            valid = ((hh + dh >= 0) & (hh + dh < H) &
                     (ww + dw >= 0) & (ww + dw < W))
            masks[kh * 3 + kw, 0, :] = valid.reshape(-1).astype(np.float32)
    return masks


@lru_cache(maxsize=None)
def _roll_sign():
    """+1 if pltpu.roll follows the np.roll convention (positive shift moves
    elements toward higher indices), else -1.  One-off (8,128) probe so the
    tap-shift direction stays correct across Mosaic versions."""
    x = np.arange(8 * 128, dtype=np.float32).reshape(8, 128)

    def probe(x_ref, o_ref):
        o_ref[...] = pltpu.roll(x_ref[...], shift=1, axis=1)

    y = pl.pallas_call(
        probe, out_shape=jax.ShapeDtypeStruct((8, 128), jnp.float32))(jnp.asarray(x))
    return 1 if np.allclose(np.asarray(y), np.roll(x, 1, axis=1)) else -1


# ---------------------------------------------------------------------------
# Fused DecoderBlock kernel: one batch element per grid step.
# ---------------------------------------------------------------------------
def _decoder_block_kernel(x_ref, llf_ref, interp_ref, mask_ref,
                          w1_ref, b1_ref, w2x_ref, w2l_ref, b2_ref,
                          w3_ref, b3_ref, w4_ref, b4_ref,
                          o_ref, y_taps, *, H, W, roll_sign):
    """All activations are (channels, H*W) -- spatial axis on the lanes.

    x_ref      (1, Cx, Hin*Win)   high-level features (to be upsampled)
    llf_ref    (1, Cf, H*W)       low-level features
    interp_ref (Hin*Win, H*W)     bilinear align_corners interpolation matrix
    mask_ref   (9, 1, H*W)        per-tap validity masks for the 3x3 convs
    w*/b*      BN-folded conv weights / biases
    o_ref      (1, n_classes-1, H*W)
    y_taps     VMEM scratch (9*Cmid, H*W): all-tap responses of a 3x3 conv
    """
    HW = H * W
    cmid = w3_ref.shape[1]
    f32 = jnp.float32

    def gather_taps():
        # out[:, p] = sum_k mask_k[p] * y_taps[k*cmid:(k+1)*cmid, p + s_k]
        acc = jnp.zeros((cmid, HW), f32)
        for kh in range(3):
            for kw in range(3):
                k = kh * 3 + kw
                s = (kh - 1) * W + (kw - 1)          # flat spatial offset of this tap
                y_k = y_taps[k * cmid:(k + 1) * cmid, :]
                if s == 0:
                    acc = acc + y_k                  # centre tap: always valid
                else:
                    rolled = pltpu.roll(y_k, shift=(roll_sign * -s) % HW, axis=1)
                    acc = acc + mask_ref[k] * rolled
        return acc

    # conv1 (1x1, no bias) + folded BN + ReLU on the low-level features.
    y1 = jnp.dot(w1_ref[...], llf_ref[0], preferred_element_type=f32)
    y1 = jnp.maximum(y1 + b1_ref[...], 0.0)                               # (Cf, HW)

    # Bilinear upsample (align_corners=True) of x: one matmul, lane-dense output.
    xu = jnp.dot(x_ref[0], interp_ref[...], preferred_element_type=f32)   # (Cx, HW)

    # last_conv[0:3]: 3x3 conv on concat(x_up, llf) + folded BN + ReLU.
    # Concat folded into the weights; all 9 taps from one contraction per input.
    y_taps[...] = (jnp.dot(w2x_ref[...], xu, preferred_element_type=f32) +
                   jnp.dot(w2l_ref[...], y1, preferred_element_type=f32))
    z = jnp.maximum(gather_taps() + b2_ref[...], 0.0)                     # (Cmid, HW)
    # Dropout(0.1): identity in eval mode.

    # last_conv[4:7]: 3x3 conv + folded BN + ReLU (single K=Cmid contraction).
    y_taps[...] = jnp.dot(w3_ref[...], z, preferred_element_type=f32)
    z = jnp.maximum(gather_taps() + b3_ref[...], 0.0)                     # (Cmid, HW)

    # last_conv[8]: 1x1 conv with bias (logits, no activation).
    out = jnp.dot(w4_ref[...], z, preferred_element_type=f32) + b4_ref[...]
    o_ref[0] = out.astype(o_ref.dtype)


def decoder_block_forward(x, low_level_feat, params, *, eps=1e-5):
    """Inference-mode DecoderBlock.forward (running-stats BN, dropout disabled)."""
    N, cx, hin, win = x.shape
    n2, cf, H, W = low_level_feat.shape
    assert N == n2
    HW = H * W
    cmid = params["conv2_w"].shape[0]          # 256 (hardcoded by the module)
    ncls_m1 = params["conv4_w"].shape[0]       # n_classes - 1
    f32 = jnp.float32

    def fold_bn(bn):
        gamma, beta, mean, var = bn
        scale = gamma / jnp.sqrt(var + eps)
        return scale, beta - mean * scale

    def taps_matrix(w_oihw):                   # (O, I, 3, 3) -> (9*O, I), tap-major rows
        o, i = w_oihw.shape[0], w_oihw.shape[1]
        return jnp.transpose(w_oihw, (2, 3, 0, 1)).reshape(9 * o, i)

    # --- fold inference BatchNorm into the conv weights / biases (review item) ---
    s1, b1 = fold_bn(params["bn1"])
    w1 = (params["conv1_w"].reshape(cf, cf) * s1[:, None]).astype(f32)

    s2, b2 = fold_bn(params["bn2"])
    w2f = params["conv2_w"] * s2[:, None, None, None]
    w2x = taps_matrix(w2f[:, :cx]).astype(f32)          # acts on upsampled x
    w2l = taps_matrix(w2f[:, cx:]).astype(f32)          # acts on processed low-level feat

    s3, b3 = fold_bn(params["bn3"])
    w3 = taps_matrix(params["conv3_w"] * s3[:, None, None, None]).astype(f32)

    w4 = params["conv4_w"].reshape(ncls_m1, cmid).astype(f32)

    b1 = b1[:, None].astype(f32)
    b2 = b2[:, None].astype(f32)
    b3 = b3[:, None].astype(f32)
    b4 = params["conv4_b"][:, None].astype(f32)

    # --- shape-only constants: bilinear matrix + 3x3 tap validity masks ---
    interp_t = jnp.asarray(
        np.kron(_interp_matrix_1d(H, hin), _interp_matrix_1d(W, win)).T, dtype=f32)
    masks = jnp.asarray(_tap_masks(H, W))

    # NCHW -> (N, C, H*W): contiguous reshapes only, no pad / transpose HBM pass.
    x_flat = x.reshape(N, cx, hin * win).astype(f32)
    llf_flat = low_level_feat.reshape(N, cf, HW).astype(f32)

    kernel = partial(_decoder_block_kernel, H=H, W=W, roll_sign=_roll_sign())

    out = pl.pallas_call(
        kernel,
        out_shape=jax.ShapeDtypeStruct((N, ncls_m1, HW), f32),
        grid_spec=pltpu.PrefetchScalarGridSpec(
            num_scalar_prefetch=0,
            grid=(N,),
            in_specs=[
                pl.BlockSpec((1, cx, hin * win), lambda n: (n, 0, 0)),
                pl.BlockSpec((1, cf, HW), lambda n: (n, 0, 0)),
                pl.BlockSpec((hin * win, HW), lambda n: (0, 0)),
                pl.BlockSpec((9, 1, HW), lambda n: (0, 0, 0)),
                pl.BlockSpec((cf, cf), lambda n: (0, 0)),
                pl.BlockSpec((cf, 1), lambda n: (0, 0)),
                pl.BlockSpec((9 * cmid, cx), lambda n: (0, 0)),
                pl.BlockSpec((9 * cmid, cf), lambda n: (0, 0)),
                pl.BlockSpec((cmid, 1), lambda n: (0, 0)),
                pl.BlockSpec((9 * cmid, cmid), lambda n: (0, 0)),
                pl.BlockSpec((cmid, 1), lambda n: (0, 0)),
                pl.BlockSpec((ncls_m1, cmid), lambda n: (0, 0)),
                pl.BlockSpec((ncls_m1, 1), lambda n: (0, 0)),
            ],
            out_specs=pl.BlockSpec((1, ncls_m1, HW), lambda n: (n, 0, 0)),
            scratch_shapes=[pltpu.VMEM((9 * cmid, HW), f32)],
        ),
        compiler_params=pltpu.CompilerParams(
            dimension_semantics=("parallel",),
            vmem_limit_bytes=48 * 1024 * 1024),
    )(x_flat, llf_flat, interp_t, masks, w1, b1, w2x, w2l, b2, w3, b3, w4, b4)

    return out.reshape(N, ncls_m1, H, W)     # already NCHW -- no transpose needed


# ---------------------------------------------------------------------------
# Pure-JAX reference (mirrors the PyTorch module in eval mode).
# ---------------------------------------------------------------------------
def _bilinear_align_corners_ref(x, out_h, out_w):
    n, c, hin, win = x.shape
    hs = (jnp.arange(out_h, dtype=jnp.float32) * (hin - 1) / (out_h - 1)
          if out_h > 1 else jnp.zeros((out_h,), jnp.float32))
    ws = (jnp.arange(out_w, dtype=jnp.float32) * (win - 1) / (out_w - 1)
          if out_w > 1 else jnp.zeros((out_w,), jnp.float32))
    h0 = jnp.clip(jnp.floor(hs).astype(jnp.int32), 0, hin - 1)
    w0 = jnp.clip(jnp.floor(ws).astype(jnp.int32), 0, win - 1)
    h1 = jnp.minimum(h0 + 1, hin - 1)
    w1 = jnp.minimum(w0 + 1, win - 1)
    fh = (hs - h0.astype(jnp.float32))[:, None]
    fw = (ws - w0.astype(jnp.float32))[None, :]
    gather = lambda hi, wi: x[:, :, hi[:, None], wi[None, :]]
    top = gather(h0, w0) * (1.0 - fw) + gather(h0, w1) * fw
    bot = gather(h1, w0) * (1.0 - fw) + gather(h1, w1) * fw
    return top * (1.0 - fh) + bot * fh


def _reference_forward(x, low_level_feat, params, *, eps=1e-5):
    hp = jax.lax.Precision.HIGHEST

    def conv(inp, w, pad):
        return jax.lax.conv_general_dilated(
            inp, w, window_strides=(1, 1),
            padding=((pad, pad), (pad, pad)),
            dimension_numbers=("NCHW", "OIHW", "NCHW"), precision=hp)

    def bn(y, stats):
        gamma, beta, mean, var = stats
        scale = gamma / jnp.sqrt(var + eps)
        return (y * scale[None, :, None, None]
                + (beta - mean * scale)[None, :, None, None])

    llf = jnp.maximum(bn(conv(low_level_feat, params["conv1_w"], 0), params["bn1"]), 0.0)
    xu = _bilinear_align_corners_ref(x, llf.shape[2], llf.shape[3])
    cat = jnp.concatenate([xu, llf], axis=1)
    z = jnp.maximum(bn(conv(cat, params["conv2_w"], 1), params["bn2"]), 0.0)
    z = jnp.maximum(bn(conv(z, params["conv3_w"], 1), params["bn3"]), 0.0)
    return conv(z, params["conv4_w"], 0) + params["conv4_b"][None, :, None, None]


if __name__ == "__main__":
    # DecoderBlock(in_channels=4, n_filters=4, n_classes=3); last_conv width 256
    # is hardcoded by the module.
    N = 2
    in_channels = 4       # channels of x (high-level features)
    n_filters = 4         # channels of low_level_feat
    n_classes = 3         # output channels = n_classes - 1 = 2
    cmid = 256
    H = W = 16            # low-level spatial size (output resolution)
    hin = win = 8         # x spatial size (bilinearly upsampled to H x W)

    key = jax.random.PRNGKey(0)
    k = jax.random.split(key, 10)

    def kaiming(kk, shape):   # torch.nn.init.kaiming_normal_ (fan_in, gain sqrt(2))
        fan_in = shape[1] * shape[2] * shape[3]
        return jax.random.normal(kk, shape, jnp.float32) * jnp.sqrt(2.0 / fan_in)

    def bn_params(kk, c):     # weight=1, bias=0 (per _init_weight); random running stats
        km, kv = jax.random.split(kk)
        return (jnp.ones((c,), jnp.float32), jnp.zeros((c,), jnp.float32),
                0.2 * jax.random.normal(km, (c,), jnp.float32),
                0.5 + jax.random.uniform(kv, (c,), jnp.float32))

    params = {
        "conv1_w": kaiming(k[0], (n_filters, n_filters, 1, 1)),
        "bn1": bn_params(k[1], n_filters),
        "conv2_w": kaiming(k[2], (cmid, in_channels + n_filters, 3, 3)),
        "bn2": bn_params(k[3], cmid),
        "conv3_w": kaiming(k[4], (cmid, cmid, 3, 3)),
        "bn3": bn_params(k[5], cmid),
        "conv4_w": kaiming(k[6], (n_classes - 1, cmid, 1, 1)),
        "conv4_b": 0.1 * jax.random.normal(k[7], (n_classes - 1,), jnp.float32),
    }

    x = jax.random.normal(k[8], (N, in_channels, hin, win), jnp.float32)
    llf = jax.random.normal(k[9], (N, n_filters, H, W), jnp.float32)

    out = decoder_block_forward(x, llf, params)
    out = jax.block_until_ready(out)

    ref = _reference_forward(x, llf, params)
    assert out.shape == (N, n_classes - 1, H, W)
    max_err = float(jnp.max(jnp.abs(out - ref)))
    # Tolerance leaves headroom for MXU default-precision operand rounding.
    assert jnp.allclose(out, ref, atol=2e-2, rtol=2e-2), (
        f"mismatch vs reference (max abs err {max_err:.3e})")

    print("KERNEL_OK")
</pallas_src>

<mosaic_0001>
module attributes {stable_mosaic.version = 11 : i64} {
  func.func @probe(%arg0: memref<8x128xf32, #tpu.memory_space<vmem>>, %arg1: memref<8x128xf32, #tpu.memory_space<vmem>>) attributes {dimension_semantics = [], scalar_prefetch = 0 : i64, scratch_operands = 0 : i64, tpu.core_type = #tpu.core_type<tc>} {
    %c0 = arith.constant 0 : index
    %c0_0 = arith.constant 0 : index
    %0 = vector.load %arg0[%c0, %c0_0] : memref<8x128xf32, #tpu.memory_space<vmem>>, vector<8x128xf32>
    %c1_i32 = arith.constant 1 : i32
    %1 = tpu.dynamic_rotate %0 by %c1_i32 dim 1 : vector<8x128xf32>, i32 -> vector<8x128xf32>
    %c0_1 = arith.constant 0 : index
    %c0_2 = arith.constant 0 : index
    %2 = vector.load %arg1[%c0_1, %c0_2] : memref<8x128xf32, #tpu.memory_space<vmem>>, vector<8x128xf32>
    tpu.vector_store %arg1[%c0_1, %c0_2], %1 {strides = array<i32>} : memref<8x128xf32, #tpu.memory_space<vmem>>, vector<8x128xf32>,
    return
  }
}

</mosaic_0001>

<llo_original>
// kernel: tpu_custom_call.1
$region0: #{tpu_custom_call.1}
  #allocation0 [shape = 'u32[]', space=smem, size = 0x4, offset = 0x4, fixed_abs, tag = 'smem constant byte address 0x4 - core index']
  #allocation1 [shape = 'u32[144,128]{1,0:T(1,128)}', space=vmem, size = 0x12000, scoped, tag = 'internal scratch']
  %s0 = inlined_call_operand.hbm [shape: f32[8,128], index: 0, kind: input, shape index: {}]
  %s1 = inlined_call_operand.hbm [shape: f32[8,128], index: 1, kind: output, shape index: {}]
  %s2 = sld [smem:[#allocation0]]
  $region18: #{tpu_custom_call.1} parent=0
    _
  %s4 = ssub.s32 1, %s2
  %s5 = scalar_select 0, %s4, %s2
  $region1: #{tpu_custom_call.1} parent=0
    #allocation2 [shape = 'u8[4096]{0}', space=vmem, size = 0x1000, scoped, tag = 'input window, operand 0, single buffered']
    #allocation3 [shape = 's32[1]{0}', space=sflag, size = 0x4, scoped, tag = 'scoped memory for tpu_custom_call.1']
    #allocation4 [shape = 's32[1]{0}', space=sflag, size = 0x4, scoped, tag = 'scoped memory for tpu_custom_call.1']
    #allocation5 [shape = 'u8[4096]{0}', space=vmem, size = 0x1000, scoped, tag = 'output window, operand 0, single buffered']
    %6 = vsyncpa [#allocation3], 0
    %7 = vsyncpa [#allocation4], 0
    // Predicated region
    $region2: #{tpu_custom_call.1} parent=1 // pred_check
      _
    $region3: #{tpu_custom_call.1} parent=1 // pred_check_branch
      %9 = sbr.rel (0) target = $region5
    $region4: #{tpu_custom_call.1} parent=1 // pred_region
      %s11 = ssub.s32 128, 128
      %12 = vsyncadd [#allocation3], %s11
      %s14 = sshll.u32 [#allocation2], 4
      %s15 = int_to_ptr.vmem [resolvable:$true] %s14
      %17 = dma.hbm_to_vmem [thread:$0]  %s0, 128, %s15, [#allocation3]
    $region5: #{tpu_custom_call.1} parent=1 // pred_fallthru
      _
    // Predicated region
    $region6: #{tpu_custom_call.1} parent=1 // pred_check
      _
    $region7: #{tpu_custom_call.1} parent=1 // pred_check_branch
      %19 = sbr.rel (0) target = $region9
    $region8: #{tpu_custom_call.1} parent=1 // pred_region
      %20 = dma.done [#allocation3], 128
    $region9: #{tpu_custom_call.1} parent=1 // pred_fallthru
      _
    %v21 = vld [vmem:[#allocation2] sm:$0xff]
    %22 = vrot.lane.b32.xlu0 %v21, 1
    %v23 = vpop.permute.xlu0 %22
    %24 = vst [vmem:[#allocation5] sm:$0xff] %v23
    // Predicated region
    $region10: #{tpu_custom_call.1} parent=1 // pred_check
      _
    $region11: #{tpu_custom_call.1} parent=1 // pred_check_branch
      %26 = sbr.rel (0) target = $region13
    $region12: #{tpu_custom_call.1} parent=1 // pred_region
      %s28 = ssub.s32 128, 128
      %29 = vsyncadd [#allocation4], %s28
      %s31 = sshll.u32 [#allocation5], 4
      %s32 = int_to_ptr.vmem [resolvable:$true] %s31
      %34 = dma.vmem_to_hbm [thread:$0]  %s32, 128, %s1, [#allocation4]
    $region13: #{tpu_custom_call.1} parent=1 // pred_fallthru
      _
    // Predicated region
    $region14: #{tpu_custom_call.1} parent=1 // pred_check
      _
    $region15: #{tpu_custom_call.1} parent=1 // pred_check_branch
      %36 = sbr.rel (0) target = $region17
    $region16: #{tpu_custom_call.1} parent=1 // pred_region
      %37 = dma.done [#allocation4], 128
    $region17: #{tpu_custom_call.1} parent=1 // pred_fallthru
      _
    %38 = vsyncpa [#allocation3], 1
    %39 = vsyncpa [#allocation4], 1

</llo_original>
